<compile_context>
chip_gen: v5e
topology: v5e:2x2
jax: 0.10.0
libtpu: 0.0.40
codegen_flags: <defaults>
</compile_context>

<pallas_src>
import functools
import math

import jax
import jax.numpy as jnp
import numpy as np
from jax.experimental import pallas as pl
from jax.experimental.pallas import tpu as pltpu


# ----------------------------------------------------------------------------
# Fused attention kernel: one grid step handles a block of BB batch elements.
# ----------------------------------------------------------------------------
def _attention_kernel(q_ref, k_ref, v_ref, o_ref, *, scale):
    # q_ref / k_ref / v_ref / o_ref : (BB, L, D) VMEM blocks.
    q = q_ref[...].astype(jnp.float32)
    k = k_ref[...].astype(jnp.float32)
    v = v_ref[...].astype(jnp.float32)

    # Scores (BB, L, L): batched matmul on the MXU, f32 accumulation.
    s = jnp.einsum("bqd,bkd->bqk", q, k, preferred_element_type=jnp.float32)
    s = s * scale

    # Numerically stable softmax along the key axis (stays in VMEM/vregs).
    m = jnp.max(s, axis=-1, keepdims=True)
    p = jnp.exp(s - m)
    l = jnp.sum(p, axis=-1, keepdims=True)
    attn = p / l

    out = jnp.einsum("bqk,bkd->bqd", attn, v, preferred_element_type=jnp.float32)
    o_ref[...] = out.astype(o_ref.dtype)


def _pick_block_b(B, L, D):
    """Batch-block size: ~1 MiB of VMEM per step, but keep >=8 grid steps
    (pipelining + megacore sharding on v7x) when the batch allows it."""
    per_elem_bytes = 4 * L * (4 * D + L)          # q, k, v, out + (L, L) scores, f32
    bb = max(1, min(B, (1 << 20) // max(per_elem_bytes, 1)))
    if B >= 8:
        bb = min(bb, max(1, B // 8))
    return bb


def flat_attention_pallas(q, k, v, *, block_b=None):
    """Scaled-dot-product attention on flattened (B, L, D) tensors."""
    B, L, D = q.shape
    bb = block_b if block_b is not None else _pick_block_b(B, L, D)
    Bp = ((B + bb - 1) // bb) * bb
    if Bp != B:  # pad batch to a block multiple; padded rows are discarded below
        pad = ((0, Bp - B), (0, 0), (0, 0))
        q, k, v = jnp.pad(q, pad), jnp.pad(k, pad), jnp.pad(v, pad)

    spec = pl.BlockSpec((bb, L, D), lambda b: (b, 0, 0))
    scale = 1.0 / math.sqrt(D)

    cost = pl.CostEstimate(
        flops=4 * Bp * L * L * D,                       # QK^T + PV
        transcendentals=Bp * L * L,                     # exp in softmax
        bytes_accessed=4 * Bp * L * D * q.dtype.itemsize,
    )

    out = pl.pallas_call(
        functools.partial(_attention_kernel, scale=scale),
        out_shape=jax.ShapeDtypeStruct((Bp, L, D), q.dtype),
        grid=(Bp // bb,),
        in_specs=[spec, spec, spec],
        out_specs=spec,
        compiler_params=pltpu.CompilerParams(
            dimension_semantics=("parallel",)),
        cost_estimate=cost,
    )(q, k, v)
    return out[:B] if Bp != B else out


# ----------------------------------------------------------------------------
# AxialAttention module port (axis plumbing in plain JAX, attention in Pallas)
# ----------------------------------------------------------------------------
def shift_dim(x, src_dim=-1, dest_dim=-1):
    # JAX equivalent of the PyTorch helper: remove src_dim, insert at dest_dim.
    return jnp.moveaxis(x, src_dim, dest_dim)


class AxialAttention:
    """Pallas-backed port of the PyTorch AxialAttention module."""

    def __init__(self, n_dim, axial_dim):
        if axial_dim < 0:
            axial_dim = 2 + n_dim + 1 + axial_dim
        else:
            axial_dim += 2  # account for batch, head dims
        self.axial_dim = axial_dim

    def __call__(self, q, k, v, decode_step=None, decode_idx=None):
        # decode_step / decode_idx are unused by the reference forward pass.
        # TODO(synk): mask / attention-dropout branches of the reference
        # scaled_dot_product_attention are never exercised here (mask=None,
        # p=0.0) and are omitted from the kernel.
        q = shift_dim(q, self.axial_dim, -2)
        k = shift_dim(k, self.axial_dim, -2)
        v = shift_dim(v, self.axial_dim, -2)
        old_shape = v.shape

        qf = q.reshape(-1, q.shape[-2], q.shape[-1])
        kf = k.reshape(-1, k.shape[-2], k.shape[-1])
        vf = v.reshape(-1, v.shape[-2], v.shape[-1])

        out = flat_attention_pallas(qf, kf, vf)
        out = out.reshape(old_shape)
        out = shift_dim(out, -2, self.axial_dim)
        return out


# ----------------------------------------------------------------------------
# Pure-JAX reference for a correctness cross-check
# ----------------------------------------------------------------------------
def _ref_axial_attention(q, k, v, n_dim, axial_dim):
    if axial_dim < 0:
        ad = 2 + n_dim + 1 + axial_dim
    else:
        ad = axial_dim + 2
    qs = jnp.moveaxis(q, ad, -2)
    ks = jnp.moveaxis(k, ad, -2)
    vs = jnp.moveaxis(v, ad, -2)
    attn = jnp.einsum("...qd,...kd->...qk", qs, ks) / np.sqrt(qs.shape[-1])
    attn = jax.nn.softmax(attn, axis=-1)
    out = jnp.einsum("...qk,...kd->...qd", attn, vs)
    return jnp.moveaxis(out, -2, ad)


# ----------------------------------------------------------------------------
if __name__ == "__main__":
    key = jax.random.PRNGKey(0)

    # (batch, n_head, d1, d2, head_dim) with n_dim=2 spatial dims.
    batch, heads, d1, d2, hidden = 2, 4, 8, 16, 32
    n_dim, axial_dim = 2, -2          # attend along the last spatial dim (d2)

    kq, kk, kv = jax.random.split(key, 3)
    q = jax.random.normal(kq, (batch, heads, d1, d2, hidden), jnp.float32)
    k = jax.random.normal(kk, (batch, heads, d1, d2, hidden), jnp.float32)
    v = jax.random.normal(kv, (batch, heads, d1, d2, hidden), jnp.float32)

    attn_mod = AxialAttention(n_dim=n_dim, axial_dim=axial_dim)
    fwd = jax.jit(lambda q, k, v: attn_mod(q, k, v, None, None))

    out = jax.block_until_ready(fwd(q, k, v))

    out_ref = _ref_axial_attention(q, k, v, n_dim, axial_dim)
    assert out.shape == q.shape
    assert jnp.max(jnp.abs(out - out_ref)) < 2e-5, "mismatch vs JAX reference"

    print("KERNEL_OK")
</pallas_src>

<mosaic_0001>
module attributes {stable_mosaic.version = 11 : i64} {
  func.func @_attention_kernel(%arg0: i32, %arg1: memref<8x16x32xf32, #tpu.memory_space<vmem>>, %arg2: memref<8x16x32xf32, #tpu.memory_space<vmem>>, %arg3: memref<8x16x32xf32, #tpu.memory_space<vmem>>, %arg4: memref<8x16x32xf32, #tpu.memory_space<vmem>>) attributes {dimension_semantics = [#tpu.dimension_semantics<parallel>], iteration_bounds = array<i64: 8>, scalar_prefetch = 0 : i64, scratch_operands = 0 : i64, tpu.core_type = #tpu.core_type<tc>, window_params = [{transform_indices = @transform_0, window_bounds = array<i64: 8, 16, 32>}, {transform_indices = @transform_1, window_bounds = array<i64: 8, 16, 32>}, {transform_indices = @transform_2, window_bounds = array<i64: 8, 16, 32>}, {transform_indices = @transform_3, window_bounds = array<i64: 8, 16, 32>}]} {
    %c0 = arith.constant 0 : index
    %c0_0 = arith.constant 0 : index
    %c0_1 = arith.constant 0 : index
    %0 = vector.load %arg1[%c0, %c0_0, %c0_1] : memref<8x16x32xf32, #tpu.memory_space<vmem>>, vector<8x16x32xf32>
    %c0_2 = arith.constant 0 : index
    %c0_3 = arith.constant 0 : index
    %c0_4 = arith.constant 0 : index
    %1 = vector.load %arg2[%c0_2, %c0_3, %c0_4] : memref<8x16x32xf32, #tpu.memory_space<vmem>>, vector<8x16x32xf32>
    %c0_5 = arith.constant 0 : index
    %c0_6 = arith.constant 0 : index
    %c0_7 = arith.constant 0 : index
    %2 = vector.load %arg3[%c0_5, %c0_6, %c0_7] : memref<8x16x32xf32, #tpu.memory_space<vmem>>, vector<8x16x32xf32>
    "tpu.trace_start"() <{level = 10 : i32, message = "bqd,bkd->bqk"}> : () -> ()
    %cst = arith.constant dense<0.000000e+00> : vector<8x16x16xf32>
    %3 = tpu.matmul %0, %1, %cst {dimension_numbers = #tpu.dot_dimension_numbers<[2], [2], [1], [1], [0, 0, 0, 1, 1, 1], [0], [0]>} : vector<8x16x32xf32>, vector<8x16x32xf32>, vector<8x16x16xf32> -> vector<8x16x16xf32>
    "tpu.trace_stop"() : () -> ()
    %cst_8 = arith.constant 0.176776692 : f32
    %4 = vector.broadcast %cst_8 : f32 to vector<8x16x16xf32>
    %5 = arith.mulf %3, %4 : vector<8x16x16xf32>
    %cst_9 = arith.constant dense<0xFF800000> : vector<8x16xf32>
    %6 = vector.multi_reduction <maximumf>, %5, %cst_9 [2] : vector<8x16x16xf32> to vector<8x16xf32>
    %7 = vector.shape_cast %6 : vector<8x16xf32> to vector<8x16x1xf32>
    %8 = vector.broadcast %7 : vector<8x16x1xf32> to vector<8x16x16xf32>
    %9 = arith.subf %5, %8 : vector<8x16x16xf32>
    %10 = math.exp %9 : vector<8x16x16xf32>
    %cst_10 = arith.constant dense<0.000000e+00> : vector<8x16xf32>
    %11 = vector.multi_reduction <add>, %10, %cst_10 [2] : vector<8x16x16xf32> to vector<8x16xf32>
    %12 = vector.shape_cast %11 : vector<8x16xf32> to vector<8x16x1xf32>
    %13 = vector.broadcast %12 : vector<8x16x1xf32> to vector<8x16x16xf32>
    %14 = arith.divf %10, %13 : vector<8x16x16xf32>
    "tpu.trace_start"() <{level = 10 : i32, message = "bqk,bkd->bqd"}> : () -> ()
    %cst_11 = arith.constant dense<0.000000e+00> : vector<8x16x32xf32>
    %15 = tpu.matmul %14, %2, %cst_11 {dimension_numbers = #tpu.dot_dimension_numbers<[2], [1], [1], [2], [0, 0, 0, 1, 1, 2], [0], [0]>} : vector<8x16x16xf32>, vector<8x16x32xf32>, vector<8x16x32xf32> -> vector<8x16x32xf32>
    "tpu.trace_stop"() : () -> ()
    %c0_12 = arith.constant 0 : index
    %c0_13 = arith.constant 0 : index
    %c0_14 = arith.constant 0 : index
    %16 = vector.load %arg4[%c0_12, %c0_13, %c0_14] : memref<8x16x32xf32, #tpu.memory_space<vmem>>, vector<8x16x32xf32>
    tpu.vector_store %arg4[%c0_12, %c0_13, %c0_14], %15 {strides = array<i32>} : memref<8x16x32xf32, #tpu.memory_space<vmem>>, vector<8x16x32xf32>,
    return
  }
  func.func @transform_0(%arg0: i32) -> (i32, i32, i32) {
    %c0_i32 = arith.constant 0 : i32
    %c0_i32_0 = arith.constant 0 : i32
    %c0_i32_1 = arith.constant 0 : i32
    return %arg0, %c0_i32, %c0_i32_0 : i32, i32, i32
  }
  func.func @transform_1(%arg0: i32) -> (i32, i32, i32) {
    %c0_i32 = arith.constant 0 : i32
    %c0_i32_0 = arith.constant 0 : i32
    %c0_i32_1 = arith.constant 0 : i32
    return %arg0, %c0_i32, %c0_i32_0 : i32, i32, i32
  }
  func.func @transform_2(%arg0: i32) -> (i32, i32, i32) {
    %c0_i32 = arith.constant 0 : i32
    %c0_i32_0 = arith.constant 0 : i32
    %c0_i32_1 = arith.constant 0 : i32
    return %arg0, %c0_i32, %c0_i32_0 : i32, i32, i32
  }
  func.func @transform_3(%arg0: i32) -> (i32, i32, i32) {
    %c0_i32 = arith.constant 0 : i32
    %c0_i32_0 = arith.constant 0 : i32
    %c0_i32_1 = arith.constant 0 : i32
    return %arg0, %c0_i32, %c0_i32_0 : i32, i32, i32
  }
}

</mosaic_0001>

<llo_original>
// kernel: _lambda_.1
$region0: #{_lambda_.1}
  #allocation0 [shape = 'u32[]', space=smem, size = 0x4, offset = 0x4, fixed_abs, tag = 'smem constant byte address 0x4 - core index']
  #allocation1 [shape = 'u32[72,128]{1,0:T(1,128)}', space=vmem, size = 0x9000, scoped, tag = 'internal scratch']
  %s0 = inlined_call_operand.hbm [shape: f32[64,16,32], index: 0, kind: input, shape index: {}]
  %s1 = inlined_call_operand.hbm [shape: f32[64,16,32], index: 1, kind: input, shape index: {}]
  %s2 = inlined_call_operand.hbm [shape: f32[64,16,32], index: 2, kind: input, shape index: {}]
  %s3 = inlined_call_operand.hbm [shape: f32[64,16,32], index: 3, kind: output, shape index: {}]
  %s4 = sld [smem:[#allocation0]]
  $region57: #{_lambda_.1} parent=0
    _
  %s6 = ssub.s32 1, %s4
  %s7 = scalar_select 0, %s6, %s4
  $region1: #{_lambda_.1} parent=0
    #allocation2 [shape = 'u8[131072]{0}', space=vmem, size = 0x20000, scoped, tag = 'input window, operand 0']
    #allocation3 [shape = 's32[2]{0}', space=sflag, size = 0x8, scoped, tag = 'scoped memory for _lambda_.1']
    #allocation4 [shape = 's32[2]{0}', space=sflag, size = 0x8, scoped, tag = 'scoped memory for _lambda_.1']
    #allocation5 [shape = 'u8[131072]{0}', space=vmem, size = 0x20000, scoped, tag = 'input window, operand 1']
    #allocation6 [shape = 's32[2]{0}', space=sflag, size = 0x8, scoped, tag = 'scoped memory for _lambda_.1']
    #allocation7 [shape = 'u8[131072]{0}', space=vmem, size = 0x20000, scoped, tag = 'input window, operand 2']
    #allocation8 [shape = 'u8[131072]{0}', space=vmem, size = 0x20000, scoped, tag = 'output window, operand 0']
    %8 = vsyncpa [#allocation3], 0
    %s9 = scalar_lea.sflag [#allocation3], 1
    %10 = vsyncpa %s9, 0
    %11 = vsyncpa [#allocation6], 0
    %s12 = scalar_lea.sflag [#allocation6], 1
    %13 = vsyncpa %s12, 0
    %14 = vsyncpa [#allocation4], 0
    %s15 = scalar_lea.sflag [#allocation4], 1
    %16 = vsyncpa %s15, 0
    loop: start=0, step=1, limit=10
    $region2: #{_lambda_.1} parent=1 // loop_pre_header
      _
    $region3: #{_lambda_.1} parent=1 // loop_header
      %s18 = sphi 0, %s22
      %p19 = scmp.ge.s32.totalorder %s18, 10
      %s28 = sphi 0, %s30
      %s31 = sphi 0, %s28
      %s32 = sphi 0, %s31
      %s48 = sphi 0, %s32
      %s54 = sphi 0, %s56
      %s57 = sphi 0, %s54
      %s58 = sphi 0, %s57
      %s74 = sphi 0, %s58
      %s80 = sphi 0, %s82
      %s83 = sphi 0, %s80
      %s84 = sphi 0, %s83
      %s100 = sphi 0, %s84
      %s106 = sphi 0, %s108
      %s109 = sphi 0, %s106
      %s110 = sphi 0, %s109
      %s126 = sphi 0, %s110
    $region4: #{_lambda_.1} parent=1 // loop_header_branch
      %21 = sbr.rel (%p19) target = $region8
    $region5: #{_lambda_.1} parent=1 // loop_body
      %s23 = ssub.s32 %s18, 1
      %s24 = ssub.s32 %s18, 2
      %s25 = sadd.s32 %s18, 1
      %s26 = ssub.s32 %s18, %s25
      %p27 = scmp.eq.s32.totalorder %s26, 0
      %s29 = sadd.s32 %s28, 1
      %s30 = scalar_select %p27, %s28, %s29
      %p33 = pneg %p27
      %p34 = scmp.eq.s32.totalorder %s18, 7
      %p35 = por %p33, %p34
      %p36 = scmp.ne.s32.totalorder %s28, %s31
      %p37 = scmp.eq.s32.totalorder %s18, 0
      %p38 = por %p36, %p37
      %p39 = scmp.ne.s32.totalorder %s28, %s31
      %p40 = scmp.eq.s32.totalorder %s23, 7
      %p41 = por %p39, %p40
      %p42 = scmp.ne.s32.totalorder %s31, %s32
      %p43 = scmp.eq.s32.totalorder %s23, 0
      %p44 = por %p42, %p43
      %p45 = scmp.ne.s32.totalorder %s31, %s32
      %p46 = scmp.eq.s32.totalorder %s24, 7
      %p47 = por %p45, %p46
      %p49 = scmp.ne.s32.totalorder %s32, %s48
      %p50 = scmp.eq.s32.totalorder %s24, 0
      %p51 = por %p49, %p50
      %s52 = ssub.s32 %s18, %s25
      %p53 = scmp.eq.s32.totalorder %s52, 0
      %s55 = sadd.s32 %s54, 1
      %s56 = scalar_select %p53, %s54, %s55
      %p59 = pneg %p53
      %p60 = scmp.eq.s32.totalorder %s18, 7
      %p61 = por %p59, %p60
      %p62 = scmp.ne.s32.totalorder %s54, %s57
      %p63 = scmp.eq.s32.totalorder %s18, 0
      %p64 = por %p62, %p63
      %p65 = scmp.ne.s32.totalorder %s54, %s57
      %p66 = scmp.eq.s32.totalorder %s23, 7
      %p67 = por %p65, %p66
      %p68 = scmp.ne.s32.totalorder %s57, %s58
      %p69 = scmp.eq.s32.totalorder %s23, 0
      %p70 = por %p68, %p69
      %p71 = scmp.ne.s32.totalorder %s57, %s58
      %p72 = scmp.eq.s32.totalorder %s24, 7
      %p73 = por %p71, %p72
      %p75 = scmp.ne.s32.totalorder %s58, %s74
      %p76 = scmp.eq.s32.totalorder %s24, 0
      %p77 = por %p75, %p76
      %s78 = ssub.s32 %s18, %s25
      %p79 = scmp.eq.s32.totalorder %s78, 0
      %s81 = sadd.s32 %s80, 1
      %s82 = scalar_select %p79, %s80, %s81
      %p85 = pneg %p79
      %p86 = scmp.eq.s32.totalorder %s18, 7
      %p87 = por %p85, %p86
      %p88 = scmp.ne.s32.totalorder %s80, %s83
      %p89 = scmp.eq.s32.totalorder %s18, 0
      %p90 = por %p88, %p89
      %p91 = scmp.ne.s32.totalorder %s80, %s83
      %p92 = scmp.eq.s32.totalorder %s23, 7
      %p93 = por %p91, %p92
      %p94 = scmp.ne.s32.totalorder %s83, %s84
      %p95 = scmp.eq.s32.totalorder %s23, 0
      %p96 = por %p94, %p95
      %p97 = scmp.ne.s32.totalorder %s83, %s84
      %p98 = scmp.eq.s32.totalorder %s24, 7
      %p99 = por %p97, %p98
      %p101 = scmp.ne.s32.totalorder %s84, %s100
      %p102 = scmp.eq.s32.totalorder %s24, 0
      %p103 = por %p101, %p102
      %s104 = ssub.s32 %s18, %s25
      %p105 = scmp.eq.s32.totalorder %s104, 0
      %s107 = sadd.s32 %s106, 1
      %s108 = scalar_select %p105, %s106, %s107
      %p111 = pneg %p105
      %p112 = scmp.eq.s32.totalorder %s18, 7
      %p113 = por %p111, %p112
      %p114 = scmp.ne.s32.totalorder %s106, %s109
      %p115 = scmp.eq.s32.totalorder %s18, 0
      %p116 = por %p114, %p115
      %p117 = scmp.ne.s32.totalorder %s106, %s109
      %p118 = scmp.eq.s32.totalorder %s23, 7
      %p119 = por %p117, %p118
      %p120 = scmp.ne.s32.totalorder %s109, %s110
      %p121 = scmp.eq.s32.totalorder %s23, 0
      %p122 = por %p120, %p121
      %p123 = scmp.ne.s32.totalorder %s109, %s110
      %p124 = scmp.eq.s32.totalorder %s24, 7
      %p125 = por %p123, %p124
      %p127 = scmp.ne.s32.totalorder %s110, %s126
      %p128 = scmp.eq.s32.totalorder %s24, 0
      %p129 = por %p127, %p128
      %p130 = scmp.le.s32.totalorder 1, %s18
      %p131 = scmp.lt.s32.totalorder %s18, 9
      %p132 = pnand %p130, %p131
      %p133 = pneg %p132
      // Predicated region
      $region9: #{_lambda_.1} parent=5 // pred_check
        _
      $region10: #{_lambda_.1} parent=5 // pred_check_branch
        %135 = sbr.rel (%p132) target = $region12
      $region11: #{_lambda_.1} parent=5 // pred_region
        %s136 = ssub.s32 %s18, 1
      $region12: #{_lambda_.1} parent=5 // pred_fallthru
        _
      %p137 = scmp.lt.s32.totalorder %s18, 8
      // Predicated region
      $region13: #{_lambda_.1} parent=5 // pred_check
        %p138 = pneg %p137
      $region14: #{_lambda_.1} parent=5 // pred_check_branch
        %140 = sbr.rel (%p138) target = $region16
      $region15: #{_lambda_.1} parent=5 // pred_region
        // Predicated region
        $region17: #{_lambda_.1} parent=15 // pred_check
          %p141 = pneg %p38
        $region18: #{_lambda_.1} parent=15 // pred_check_branch
          %143 = sbr.rel (%p141) target = $region20
        $region19: #{_lambda_.1} parent=15 // pred_region
          %s144 = sand.u32 %s28, 1
          %s145 = scalar_lea.sflag [#allocation3], %s144
          %s146 = sand.u32 %s28, 1
          %s147 = smul.addr %s146, 128
          %s148 = scalar_lea.vmem [#allocation2], %s147
          %s149 = smul.u32 8, %s18
          %151 = vsyncadd %s145, 0
          %s152 = smul.addr %s149, 2
          %s153 = smul.addr %s152, 8
          %s154 = scalar_lea.hbm %s0, %s153
          %s155 = sshll.u32 %s154, 4
          %s156 = int_to_ptr.hbm [resolvable:$true] %s155
          %s157 = sshll.u32 %s148, 4
          %s158 = int_to_ptr.vmem [resolvable:$true] %s157
          %163 = dma.hbm_to_vmem [thread:$0]  %s156, 2048, %s158, %s145, 128, 128, 8
        $region20: #{_lambda_.1} parent=15 // pred_fallthru
          _
        // Predicated region
        $region21: #{_lambda_.1} parent=15 // pred_check
          %p164 = pneg %p64
        $region22: #{_lambda_.1} parent=15 // pred_check_branch
          %166 = sbr.rel (%p164) target = $region24
        $region23: #{_lambda_.1} parent=15 // pred_region
          %s167 = sand.u32 %s18, 1
          %s168 = scalar_lea.sflag [#allocation6], %s167
          %s169 = sand.u32 %s54, 1
          %s170 = smul.addr %s169, 128
          %s171 = scalar_lea.vmem [#allocation5], %s170
          %s172 = smul.u32 8, %s18
          %174 = vsyncadd %s168, 0
          %s175 = smul.addr %s172, 2
          %s176 = smul.addr %s175, 8
          %s177 = scalar_lea.hbm %s1, %s176
          %s178 = sshll.u32 %s177, 4
          %s179 = int_to_ptr.hbm [resolvable:$true] %s178
          %s180 = sshll.u32 %s171, 4
          %s181 = int_to_ptr.vmem [resolvable:$true] %s180
          %186 = dma.hbm_to_vmem [thread:$0]  %s179, 2048, %s181, %s168, 128, 128, 8
        $region24: #{_lambda_.1} parent=15 // pred_fallthru
          _
        // Predicated region
        $region25: #{_lambda_.1} parent=15 // pred_check
          %p187 = pneg %p90
        $region26: #{_lambda_.1} parent=15 // pred_check_branch
          %189 = sbr.rel (%p187) target = $region28
        $region27: #{_lambda_.1} parent=15 // pred_region
          %s190 = sand.u32 %s18, 1
          %s191 = scalar_lea.sflag [#allocation6], %s190
          %s192 = sand.u32 %s80, 1
          %s193 = smul.addr %s192, 128
          %s194 = scalar_lea.vmem [#allocation7], %s193
          %s195 = smul.u32 8, %s18
          %197 = vsyncadd %s191, 0
          %s198 = smul.addr %s195, 2
          %s199 = smul.addr %s198, 8
          %s200 = scalar_lea.hbm %s2, %s199
          %s201 = sshll.u32 %s200, 4
          %s202 = int_to_ptr.hbm [resolvable:$true] %s201
          %s203 = sshll.u32 %s194, 4
          %s204 = int_to_ptr.vmem [resolvable:$true] %s203
          %209 = dma.hbm_to_vmem [thread:$0]  %s202, 2048, %s204, %s191, 128, 128, 8
        $region28: #{_lambda_.1} parent=15 // pred_fallthru
          _
      $region16: #{_lambda_.1} parent=5 // pred_fallthru
        _
      %p210 = scmp.le.s32.totalorder 1, %s18
      %p211 = scmp.lt.s32.totalorder %s18, 9
      %p212 = pnand %p210, %p211
      %p213 = pneg %p212
      // Predicated region
      $region29: #{_lambda_.1} parent=5 // pred_check
        _
      $region30: #{_lambda_.1} parent=5 // pred_check_branch
        %215 = sbr.rel (%p212) target = $region32
      $region31: #{_lambda_.1} parent=5 // pred_region
        %s216 = ssub.s32 %s18, 1
        %s217 = sand.u32 %s31, 1
        %s218 = scalar_lea.sflag [#allocation3], %s217
        %s219 = sand.u32 %s31, 1
        %s220 = smul.addr %s219, 128
        %s221 = scalar_lea.vmem [#allocation2], %s220
        // Predicated region
        $region33: #{_lambda_.1} parent=31 // pred_check
          %p222 = pneg %p44
        $region34: #{_lambda_.1} parent=31 // pred_check_branch
          %224 = sbr.rel (%p222) target = $region36
        $region35: #{_lambda_.1} parent=31 // pred_region
          %226 = dma.done %s218, 2048
        $region36: #{_lambda_.1} parent=31 // pred_fallthru
          _
        %s227 = sand.u32 %s23, 1
        %s228 = scalar_lea.sflag [#allocation6], %s227
        %s229 = sand.u32 %s57, 1
        %s230 = smul.addr %s229, 128
        %s231 = scalar_lea.vmem [#allocation5], %s230
        // Predicated region
        $region37: #{_lambda_.1} parent=31 // pred_check
          %p232 = pneg %p70
        $region38: #{_lambda_.1} parent=31 // pred_check_branch
          %234 = sbr.rel (%p232) target = $region40
        $region39: #{_lambda_.1} parent=31 // pred_region
          %236 = dma.done %s228, 2048
        $region40: #{_lambda_.1} parent=31 // pred_fallthru
          _
        %s237 = sand.u32 %s23, 1
        %s238 = scalar_lea.sflag [#allocation6], %s237
        %s239 = sand.u32 %s83, 1
        %s240 = smul.addr %s239, 128
        %s241 = scalar_lea.vmem [#allocation7], %s240
        // Predicated region
        $region41: #{_lambda_.1} parent=31 // pred_check
          %p242 = pneg %p96
        $region42: #{_lambda_.1} parent=31 // pred_check_branch
          %244 = sbr.rel (%p242) target = $region44
        $region43: #{_lambda_.1} parent=31 // pred_region
          %246 = dma.done %s238, 2048
        $region44: #{_lambda_.1} parent=31 // pred_fallthru
          _
        %s247 = sand.u32 %s31, 1
        %s248 = scalar_lea.sflag [#allocation3], %s247
        %s249 = sand.u32 %s31, 1
        %s250 = smul.addr %s249, 128
        %s251 = scalar_lea.vmem [#allocation2], %s250
        %p252 = pneg %p44
        %p253 = pneg %p41
        %s254 = sand.u32 %s23, 1
        %s255 = scalar_lea.sflag [#allocation6], %s254
        %s256 = sand.u32 %s57, 1
        %s257 = smul.addr %s256, 128
        %s258 = scalar_lea.vmem [#allocation5], %s257
        %p259 = pneg %p70
        %p260 = pneg %p67
        %s261 = sand.u32 %s23, 1
        %s262 = scalar_lea.sflag [#allocation6], %s261
        %s263 = sand.u32 %s83, 1
        %s264 = smul.addr %s263, 128
        %s265 = scalar_lea.vmem [#allocation7], %s264
        %p266 = pneg %p96
        %p267 = pneg %p93
        %p268 = pneg %p122
        %p269 = pneg %p119
        %s270 = sand.u32 %s109, 1
        %s271 = scalar_lea.sflag [#allocation4], %s270
        %s272 = sand.u32 %s109, 1
        %s273 = smul.addr %s272, 128
        %s274 = scalar_lea.vmem [#allocation8], %s273
        %s275 = smul.u32 8, %s23
        %s276 = smul.u32 8, %s23
        %s277 = smul.u32 8, %s23
        %s278 = smul.u32 8, %s23
        %v279 = vld [vmem:[%s221] sm:$0xff]
        %v280 = vld [vmem:[%s221 + $0x8] sm:$0xff]
        %v281 = vld [vmem:[%s221 + $0x10] sm:$0xff]
        %v282 = vld [vmem:[%s221 + $0x18] sm:$0xff]
        %v283 = vld [vmem:[%s221 + $0x20] sm:$0xff]
        %v284 = vld [vmem:[%s221 + $0x28] sm:$0xff]
        %v285 = vld [vmem:[%s221 + $0x30] sm:$0xff]
        %v286 = vld [vmem:[%s221 + $0x38] sm:$0xff]
        %v287 = vld [vmem:[%s221 + $0x40] sm:$0xff]
        %v288 = vld [vmem:[%s221 + $0x48] sm:$0xff]
        %v289 = vld [vmem:[%s221 + $0x50] sm:$0xff]
        %v290 = vld [vmem:[%s221 + $0x58] sm:$0xff]
        %v291 = vld [vmem:[%s221 + $0x60] sm:$0xff]
        %v292 = vld [vmem:[%s221 + $0x68] sm:$0xff]
        %v293 = vld [vmem:[%s221 + $0x70] sm:$0xff]
        %v294 = vld [vmem:[%s221 + $0x78] sm:$0xff]
        %v295 = vld [vmem:[%s231] sm:$0xff]
        %v296 = vld [vmem:[%s231 + $0x8] sm:$0xff]
        %v297 = vld [vmem:[%s231 + $0x10] sm:$0xff]
        %v298 = vld [vmem:[%s231 + $0x18] sm:$0xff]
        %v299 = vld [vmem:[%s231 + $0x20] sm:$0xff]
        %v300 = vld [vmem:[%s231 + $0x28] sm:$0xff]
        %v301 = vld [vmem:[%s231 + $0x30] sm:$0xff]
        %v302 = vld [vmem:[%s231 + $0x38] sm:$0xff]
        %v303 = vld [vmem:[%s231 + $0x40] sm:$0xff]
        %v304 = vld [vmem:[%s231 + $0x48] sm:$0xff]
        %v305 = vld [vmem:[%s231 + $0x50] sm:$0xff]
        %v306 = vld [vmem:[%s231 + $0x58] sm:$0xff]
        %v307 = vld [vmem:[%s231 + $0x60] sm:$0xff]
        %v308 = vld [vmem:[%s231 + $0x68] sm:$0xff]
        %v309 = vld [vmem:[%s231 + $0x70] sm:$0xff]
        %v310 = vld [vmem:[%s231 + $0x78] sm:$0xff]
        %v311 = vld [vmem:[%s241] sm:$0xff]
        %v312 = vld [vmem:[%s241 + $0x8] sm:$0xff]
        %v313 = vld [vmem:[%s241 + $0x10] sm:$0xff]
        %v314 = vld [vmem:[%s241 + $0x18] sm:$0xff]
        %v315 = vld [vmem:[%s241 + $0x20] sm:$0xff]
        %v316 = vld [vmem:[%s241 + $0x28] sm:$0xff]
        %v317 = vld [vmem:[%s241 + $0x30] sm:$0xff]
        %v318 = vld [vmem:[%s241 + $0x38] sm:$0xff]
        %v319 = vld [vmem:[%s241 + $0x40] sm:$0xff]
        %v320 = vld [vmem:[%s241 + $0x48] sm:$0xff]
        %v321 = vld [vmem:[%s241 + $0x50] sm:$0xff]
        %v322 = vld [vmem:[%s241 + $0x58] sm:$0xff]
        %v323 = vld [vmem:[%s241 + $0x60] sm:$0xff]
        %v324 = vld [vmem:[%s241 + $0x68] sm:$0xff]
        %v325 = vld [vmem:[%s241 + $0x70] sm:$0xff]
        %v326 = vld [vmem:[%s241 + $0x78] sm:$0xff]
        %vm327 = vcmask 261120
        %v329 = vsel %vm327, %v279, 0
        %v332 = vsel %vm327, %v280, 0
        %v335 = vsel %vm327, %v295, 0
        %v338 = vsel %vm327, %v296, 0
        %340 = vmatpush.xpose.msra.mxu0 0.0
        %341 = vmatpush.xpose.msra.mxu0 0.0
        %342 = vmatpush.xpose.msra.mxu0 0.0
        %343 = vmatpush.xpose.msra.mxu0 0.0
        %344 = vmatpush.xpose.msra.mxu0 0.0
        %345 = vmatpush.xpose.msra.mxu0 0.0
        %346 = vmatpush.xpose.msra.mxu0 0.0
        %347 = vmatpush.xpose.msra.mxu0 0.0
        %348 = vmatpush.xpose.msra.mxu0 0.0
        %349 = vmatpush.xpose.msra.mxu0 0.0
        %350 = vmatpush.xpose.msra.mxu0 0.0
        %351 = vmatpush.xpose.msra.mxu0 0.0
        %352 = vmatpush.xpose.msra.mxu0 0.0
        %353 = vmatpush.xpose.msra.mxu0 0.0
        %354 = vmatpush.xpose.msra.mxu0 %v338
        %355 = vmatpush.xpose.msra.mxu0 %v335
        %356 = vmatmul.f32.gmra.mxu0 %v329
        %v357 = vpop.f32.mrf.mxu0
        %v358 = vadd.f32 0.0, %v357
        %359 = vmatmul.f32.gmra.mxu0 %v332
        %v360 = vpop.f32.mrf.mxu0
        %v361 = vadd.f32 0.0, %v360
        %362 = vdwg.mxu0
        %v364 = vsel %vm327, %v281, 0
        %v367 = vsel %vm327, %v282, 0
        %v370 = vsel %vm327, %v297, 0
        %v373 = vsel %vm327, %v298, 0
        %375 = vmatpush.xpose.msra.mxu0 0.0
        %376 = vmatpush.xpose.msra.mxu0 0.0
        %377 = vmatpush.xpose.msra.mxu0 0.0
        %378 = vmatpush.xpose.msra.mxu0 0.0
        %379 = vmatpush.xpose.msra.mxu0 0.0
        %380 = vmatpush.xpose.msra.mxu0 0.0
        %381 = vmatpush.xpose.msra.mxu0 0.0
        %382 = vmatpush.xpose.msra.mxu0 0.0
        %383 = vmatpush.xpose.msra.mxu0 0.0
        %384 = vmatpush.xpose.msra.mxu0 0.0
        %385 = vmatpush.xpose.msra.mxu0 0.0
        %386 = vmatpush.xpose.msra.mxu0 0.0
        %387 = vmatpush.xpose.msra.mxu0 0.0
        %388 = vmatpush.xpose.msra.mxu0 0.0
        %389 = vmatpush.xpose.msra.mxu0 %v373
        %390 = vmatpush.xpose.msra.mxu0 %v370
        %391 = vmatmul.f32.gmra.mxu0 %v364
        %v392 = vpop.f32.mrf.mxu0
        %v393 = vadd.f32 0.0, %v392
        %394 = vmatmul.f32.gmra.mxu0 %v367
        %v395 = vpop.f32.mrf.mxu0
        %v396 = vadd.f32 0.0, %v395
        %397 = vdwg.mxu0
        %v399 = vsel %vm327, %v283, 0
        %v402 = vsel %vm327, %v284, 0
        %v405 = vsel %vm327, %v299, 0
        %v408 = vsel %vm327, %v300, 0
        %410 = vmatpush.xpose.msra.mxu0 0.0
        %411 = vmatpush.xpose.msra.mxu0 0.0
        %412 = vmatpush.xpose.msra.mxu0 0.0
        %413 = vmatpush.xpose.msra.mxu0 0.0
        %414 = vmatpush.xpose.msra.mxu0 0.0
        %415 = vmatpush.xpose.msra.mxu0 0.0
        %416 = vmatpush.xpose.msra.mxu0 0.0
        %417 = vmatpush.xpose.msra.mxu0 0.0
        %418 = vmatpush.xpose.msra.mxu0 0.0
        %419 = vmatpush.xpose.msra.mxu0 0.0
        %420 = vmatpush.xpose.msra.mxu0 0.0
        %421 = vmatpush.xpose.msra.mxu0 0.0
        %422 = vmatpush.xpose.msra.mxu0 0.0
        %423 = vmatpush.xpose.msra.mxu0 0.0
        %424 = vmatpush.xpose.msra.mxu0 %v408
        %425 = vmatpush.xpose.msra.mxu0 %v405
        %426 = vmatmul.f32.gmra.mxu0 %v399
        %v427 = vpop.f32.mrf.mxu0
        %v428 = vadd.f32 0.0, %v427
        %429 = vmatmul.f32.gmra.mxu0 %v402
        %v430 = vpop.f32.mrf.mxu0
        %v431 = vadd.f32 0.0, %v430
        %432 = vdwg.mxu0
        %v434 = vsel %vm327, %v285, 0
        %v437 = vsel %vm327, %v286, 0
        %v440 = vsel %vm327, %v301, 0
        %v443 = vsel %vm327, %v302, 0
        %445 = vmatpush.xpose.msra.mxu0 0.0
        %446 = vmatpush.xpose.msra.mxu0 0.0
        %447 = vmatpush.xpose.msra.mxu0 0.0
        %448 = vmatpush.xpose.msra.mxu0 0.0
        %449 = vmatpush.xpose.msra.mxu0 0.0
        %450 = vmatpush.xpose.msra.mxu0 0.0
        %451 = vmatpush.xpose.msra.mxu0 0.0
        %452 = vmatpush.xpose.msra.mxu0 0.0
        %453 = vmatpush.xpose.msra.mxu0 0.0
        %454 = vmatpush.xpose.msra.mxu0 0.0
        %455 = vmatpush.xpose.msra.mxu0 0.0
        %456 = vmatpush.xpose.msra.mxu0 0.0
        %457 = vmatpush.xpose.msra.mxu0 0.0
        %458 = vmatpush.xpose.msra.mxu0 0.0
        %459 = vmatpush.xpose.msra.mxu0 %v443
        %460 = vmatpush.xpose.msra.mxu0 %v440
        %461 = vmatmul.f32.gmra.mxu0 %v434
        %v462 = vpop.f32.mrf.mxu0
        %v463 = vadd.f32 0.0, %v462
        %464 = vmatmul.f32.gmra.mxu0 %v437
        %v465 = vpop.f32.mrf.mxu0
        %v466 = vadd.f32 0.0, %v465
        %467 = vdwg.mxu0
        %v469 = vsel %vm327, %v287, 0
        %v472 = vsel %vm327, %v288, 0
        %v475 = vsel %vm327, %v303, 0
        %v478 = vsel %vm327, %v304, 0
        %480 = vmatpush.xpose.msra.mxu0 0.0
        %481 = vmatpush.xpose.msra.mxu0 0.0
        %482 = vmatpush.xpose.msra.mxu0 0.0
        %483 = vmatpush.xpose.msra.mxu0 0.0
        %484 = vmatpush.xpose.msra.mxu0 0.0
        %485 = vmatpush.xpose.msra.mxu0 0.0
        %486 = vmatpush.xpose.msra.mxu0 0.0
        %487 = vmatpush.xpose.msra.mxu0 0.0
        %488 = vmatpush.xpose.msra.mxu0 0.0
        %489 = vmatpush.xpose.msra.mxu0 0.0
        %490 = vmatpush.xpose.msra.mxu0 0.0
        %491 = vmatpush.xpose.msra.mxu0 0.0
        %492 = vmatpush.xpose.msra.mxu0 0.0
        %493 = vmatpush.xpose.msra.mxu0 0.0
        %494 = vmatpush.xpose.msra.mxu0 %v478
        %495 = vmatpush.xpose.msra.mxu0 %v475
        %496 = vmatmul.f32.gmra.mxu0 %v469
        %v497 = vpop.f32.mrf.mxu0
        %v498 = vadd.f32 0.0, %v497
        %499 = vmatmul.f32.gmra.mxu0 %v472
        %v500 = vpop.f32.mrf.mxu0
        %v501 = vadd.f32 0.0, %v500
        %502 = vdwg.mxu0
        %v504 = vsel %vm327, %v289, 0
        %v507 = vsel %vm327, %v290, 0
        %v510 = vsel %vm327, %v305, 0
        %v513 = vsel %vm327, %v306, 0
        %515 = vmatpush.xpose.msra.mxu0 0.0
        %516 = vmatpush.xpose.msra.mxu0 0.0
        %517 = vmatpush.xpose.msra.mxu0 0.0
        %518 = vmatpush.xpose.msra.mxu0 0.0
        %519 = vmatpush.xpose.msra.mxu0 0.0
        %520 = vmatpush.xpose.msra.mxu0 0.0
        %521 = vmatpush.xpose.msra.mxu0 0.0
        %522 = vmatpush.xpose.msra.mxu0 0.0
        %523 = vmatpush.xpose.msra.mxu0 0.0
        %524 = vmatpush.xpose.msra.mxu0 0.0
        %525 = vmatpush.xpose.msra.mxu0 0.0
        %526 = vmatpush.xpose.msra.mxu0 0.0
        %527 = vmatpush.xpose.msra.mxu0 0.0
        %528 = vmatpush.xpose.msra.mxu0 0.0
        %529 = vmatpush.xpose.msra.mxu0 %v513
        %530 = vmatpush.xpose.msra.mxu0 %v510
        %531 = vmatmul.f32.gmra.mxu0 %v504
        %v532 = vpop.f32.mrf.mxu0
        %v533 = vadd.f32 0.0, %v532
        %534 = vmatmul.f32.gmra.mxu0 %v507
        %v535 = vpop.f32.mrf.mxu0
        %v536 = vadd.f32 0.0, %v535
        %537 = vdwg.mxu0
        %v539 = vsel %vm327, %v291, 0
        %v542 = vsel %vm327, %v292, 0
        %v545 = vsel %vm327, %v307, 0
        %v548 = vsel %vm327, %v308, 0
        %550 = vmatpush.xpose.msra.mxu0 0.0
        %551 = vmatpush.xpose.msra.mxu0 0.0
        %552 = vmatpush.xpose.msra.mxu0 0.0
        %553 = vmatpush.xpose.msra.mxu0 0.0
        %554 = vmatpush.xpose.msra.mxu0 0.0
        %555 = vmatpush.xpose.msra.mxu0 0.0
        %556 = vmatpush.xpose.msra.mxu0 0.0
        %557 = vmatpush.xpose.msra.mxu0 0.0
        %558 = vmatpush.xpose.msra.mxu0 0.0
        %559 = vmatpush.xpose.msra.mxu0 0.0
        %560 = vmatpush.xpose.msra.mxu0 0.0
        %561 = vmatpush.xpose.msra.mxu0 0.0
        %562 = vmatpush.xpose.msra.mxu0 0.0
        %563 = vmatpush.xpose.msra.mxu0 0.0
        %564 = vmatpush.xpose.msra.mxu0 %v548
        %565 = vmatpush.xpose.msra.mxu0 %v545
        %566 = vmatmul.f32.gmra.mxu0 %v539
        %v567 = vpop.f32.mrf.mxu0
        %v568 = vadd.f32 0.0, %v567
        %569 = vmatmul.f32.gmra.mxu0 %v542
        %v570 = vpop.f32.mrf.mxu0
        %v571 = vadd.f32 0.0, %v570
        %572 = vdwg.mxu0
        %v574 = vsel %vm327, %v293, 0
        %v577 = vsel %vm327, %v294, 0
        %v580 = vsel %vm327, %v309, 0
        %v583 = vsel %vm327, %v310, 0
        %585 = vmatpush.xpose.msra.mxu0 0.0
        %586 = vmatpush.xpose.msra.mxu0 0.0
        %587 = vmatpush.xpose.msra.mxu0 0.0
        %588 = vmatpush.xpose.msra.mxu0 0.0
        %589 = vmatpush.xpose.msra.mxu0 0.0
        %590 = vmatpush.xpose.msra.mxu0 0.0
        %591 = vmatpush.xpose.msra.mxu0 0.0
        %592 = vmatpush.xpose.msra.mxu0 0.0
        %593 = vmatpush.xpose.msra.mxu0 0.0
        %594 = vmatpush.xpose.msra.mxu0 0.0
        %595 = vmatpush.xpose.msra.mxu0 0.0
        %596 = vmatpush.xpose.msra.mxu0 0.0
        %597 = vmatpush.xpose.msra.mxu0 0.0
        %598 = vmatpush.xpose.msra.mxu0 0.0
        %599 = vmatpush.xpose.msra.mxu0 %v583
        %600 = vmatpush.xpose.msra.mxu0 %v580
        %601 = vmatmul.f32.gmra.mxu0 %v574
        %v602 = vpop.f32.mrf.mxu0
        %v603 = vadd.f32 0.0, %v602
        %604 = vmatmul.f32.gmra.mxu0 %v577
        %v605 = vpop.f32.mrf.mxu0
        %v606 = vadd.f32 0.0, %v605
        %607 = vdwg.mxu0
        %v608 = vmul.f32 %v358, 0.17677669
        %v609 = vmul.f32 %v361, 0.17677669
        %v610 = vmul.f32 %v393, 0.17677669
        %v611 = vmul.f32 %v396, 0.17677669
        %v612 = vmul.f32 %v428, 0.17677669
        %v613 = vmul.f32 %v431, 0.17677669
        %v614 = vmul.f32 %v463, 0.17677669
        %v615 = vmul.f32 %v466, 0.17677669
        %v616 = vmul.f32 %v498, 0.17677669
        %v617 = vmul.f32 %v501, 0.17677669
        %v618 = vmul.f32 %v533, 0.17677669
        %v619 = vmul.f32 %v536, 0.17677669
        %v620 = vmul.f32 %v568, 0.17677669
        %v621 = vmul.f32 %v571, 0.17677669
        %v622 = vmul.f32 %v603, 0.17677669
        %v623 = vmul.f32 %v606, 0.17677669
        %vm624 = vcmask 130048
        %v625 = vsel %vm624, %v608, -inf
        %626 = vmax.xlane.f32.xlu0 %v625
        %v627 = vpop.xlane.xlu0 %626
        %v628 = vsel %vm624, %v609, -inf
        %629 = vmax.xlane.f32.xlu0 %v628
        %v630 = vpop.xlane.xlu0 %629
        %v631 = vsel %vm624, %v610, -inf
        %632 = vmax.xlane.f32.xlu0 %v631
        %v633 = vpop.xlane.xlu0 %632
        %v634 = vsel %vm624, %v611, -inf
        %635 = vmax.xlane.f32.xlu0 %v634
        %v636 = vpop.xlane.xlu0 %635
        %v637 = vsel %vm624, %v612, -inf
        %638 = vmax.xlane.f32.xlu0 %v637
        %v639 = vpop.xlane.xlu0 %638
        %v640 = vsel %vm624, %v613, -inf
        %641 = vmax.xlane.f32.xlu0 %v640
        %v642 = vpop.xlane.xlu0 %641
        %v643 = vsel %vm624, %v614, -inf
        %644 = vmax.xlane.f32.xlu0 %v643
        %v645 = vpop.xlane.xlu0 %644
        %v646 = vsel %vm624, %v615, -inf
        %647 = vmax.xlane.f32.xlu0 %v646
        %v648 = vpop.xlane.xlu0 %647
        %v649 = vsel %vm624, %v616, -inf
        %650 = vmax.xlane.f32.xlu0 %v649
        %v651 = vpop.xlane.xlu0 %650
        %v652 = vsel %vm624, %v617, -inf
        %653 = vmax.xlane.f32.xlu0 %v652
        %v654 = vpop.xlane.xlu0 %653
        %v655 = vsel %vm624, %v618, -inf
        %656 = vmax.xlane.f32.xlu0 %v655
        %v657 = vpop.xlane.xlu0 %656
        %v658 = vsel %vm624, %v619, -inf
        %659 = vmax.xlane.f32.xlu0 %v658
        %v660 = vpop.xlane.xlu0 %659
        %v661 = vsel %vm624, %v620, -inf
        %662 = vmax.xlane.f32.xlu0 %v661
        %v663 = vpop.xlane.xlu0 %662
        %v664 = vsel %vm624, %v621, -inf
        %665 = vmax.xlane.f32.xlu0 %v664
        %v666 = vpop.xlane.xlu0 %665
        %v667 = vsel %vm624, %v622, -inf
        %668 = vmax.xlane.f32.xlu0 %v667
        %v669 = vpop.xlane.xlu0 %668
        %v670 = vsel %vm624, %v623, -inf
        %671 = vmax.xlane.f32.xlu0 %v670
        %v672 = vpop.xlane.xlu0 %671
        %v673 = vsub.f32 %v608, %v627
        %v674 = vsub.f32 %v609, %v630
        %v675 = vsub.f32 %v610, %v633
        %v676 = vsub.f32 %v611, %v636
        %v677 = vsub.f32 %v612, %v639
        %v678 = vsub.f32 %v613, %v642
        %v679 = vsub.f32 %v614, %v645
        %v680 = vsub.f32 %v615, %v648
        %v681 = vsub.f32 %v616, %v651
        %v682 = vsub.f32 %v617, %v654
        %v683 = vsub.f32 %v618, %v657
        %v684 = vsub.f32 %v619, %v660
        %v685 = vsub.f32 %v620, %v663
        %v686 = vsub.f32 %v621, %v666
        %v687 = vsub.f32 %v622, %v669
        %v688 = vsub.f32 %v623, %v672
        %v689 = vmul.f32 %v673, 1.442695
        %v690 = vpow.pop %v689
        %v691 = vmul.f32 %v674, 1.442695
        %v692 = vpow.pop %v691
        %v693 = vmul.f32 %v675, 1.442695
        %v694 = vpow.pop %v693
        %v695 = vmul.f32 %v676, 1.442695
        %v696 = vpow.pop %v695
        %v697 = vmul.f32 %v677, 1.442695
        %v698 = vpow.pop %v697
        %v699 = vmul.f32 %v678, 1.442695
        %v700 = vpow.pop %v699
        %v701 = vmul.f32 %v679, 1.442695
        %v702 = vpow.pop %v701
        %v703 = vmul.f32 %v680, 1.442695
        %v704 = vpow.pop %v703
        %v705 = vmul.f32 %v681, 1.442695
        %v706 = vpow.pop %v705
        %v707 = vmul.f32 %v682, 1.442695
        %v708 = vpow.pop %v707
        %v709 = vmul.f32 %v683, 1.442695
        %v710 = vpow.pop %v709
        %v711 = vmul.f32 %v684, 1.442695
        %v712 = vpow.pop %v711
        %v713 = vmul.f32 %v685, 1.442695
        %v714 = vpow.pop %v713
        %v715 = vmul.f32 %v686, 1.442695
        %v716 = vpow.pop %v715
        %v717 = vmul.f32 %v687, 1.442695
        %v718 = vpow.pop %v717
        %v719 = vmul.f32 %v688, 1.442695
        %v720 = vpow.pop %v719
        %v721 = vsel %vm624, %v690, 0.0
        %722 = vadd.xlane.f32.xlu0 %v721
        %v723 = vpop.xlane.xlu0 %722
        %v724 = vsel %vm624, %v692, 0.0
        %725 = vadd.xlane.f32.xlu0 %v724
        %v726 = vpop.xlane.xlu0 %725
        %v727 = vsel %vm624, %v694, 0.0
        %728 = vadd.xlane.f32.xlu0 %v727
        %v729 = vpop.xlane.xlu0 %728
        %v730 = vsel %vm624, %v696, 0.0
        %731 = vadd.xlane.f32.xlu0 %v730
        %v732 = vpop.xlane.xlu0 %731
        %v733 = vsel %vm624, %v698, 0.0
        %734 = vadd.xlane.f32.xlu0 %v733
        %v735 = vpop.xlane.xlu0 %734
        %v736 = vsel %vm624, %v700, 0.0
        %737 = vadd.xlane.f32.xlu0 %v736
        %v738 = vpop.xlane.xlu0 %737
        %v739 = vsel %vm624, %v702, 0.0
        %740 = vadd.xlane.f32.xlu0 %v739
        %v741 = vpop.xlane.xlu0 %740
        %v742 = vsel %vm624, %v704, 0.0
        %743 = vadd.xlane.f32.xlu0 %v742
        %v744 = vpop.xlane.xlu0 %743
        %v745 = vsel %vm624, %v706, 0.0
        %746 = vadd.xlane.f32.xlu0 %v745
        %v747 = vpop.xlane.xlu0 %746
        %v748 = vsel %vm624, %v708, 0.0
        %749 = vadd.xlane.f32.xlu0 %v748
        %v750 = vpop.xlane.xlu0 %749
        %v751 = vsel %vm624, %v710, 0.0
        %752 = vadd.xlane.f32.xlu0 %v751
        %v753 = vpop.xlane.xlu0 %752
        %v754 = vsel %vm624, %v712, 0.0
        %755 = vadd.xlane.f32.xlu0 %v754
        %v756 = vpop.xlane.xlu0 %755
        %v757 = vsel %vm624, %v714, 0.0
        %758 = vadd.xlane.f32.xlu0 %v757
        %v759 = vpop.xlane.xlu0 %758
        %v760 = vsel %vm624, %v716, 0.0
        %761 = vadd.xlane.f32.xlu0 %v760
        %v762 = vpop.xlane.xlu0 %761
        %v763 = vsel %vm624, %v718, 0.0
        %764 = vadd.xlane.f32.xlu0 %v763
        %v765 = vpop.xlane.xlu0 %764
        %v766 = vsel %vm624, %v720, 0.0
        %767 = vadd.xlane.f32.xlu0 %v766
        %v768 = vpop.xlane.xlu0 %767
        %v769 = vrcp.pop %v723
        %v770 = vmul.f32 %v723, %v769
        %v771 = vsub.f32 1.0, %v770
        %v772 = vmul.f32 %v769, %v771
        %v773 = vadd.f32 %v769, %v772
        %vm774 = vweird.f32 %v723
        %vm775 = vweird.f32 %v769
        %vm776 = vmor %vm774, %vm775
        %v777 = vsel %vm776, %v769, %v773
        %v778 = vand.u32 2147483647, %v723
        %vm779 = vcmp.eq.f32.partialorder %v778, 8.507059e+37
        %v780 = vand.u32 %v723, 2147483648
        %v781 = vor.u32 1.1754944e-38, %v780
        %v782 = vsel %vm779, %v781, %v777
        %v783 = vmul.f32 %v690, %v782
        %v784 = vrcp.pop %v726
        %v785 = vmul.f32 %v726, %v784
        %v786 = vsub.f32 1.0, %v785
        %v787 = vmul.f32 %v784, %v786
        %v788 = vadd.f32 %v784, %v787
        %vm789 = vweird.f32 %v726
        %vm790 = vweird.f32 %v784
        %vm791 = vmor %vm789, %vm790
        %v792 = vsel %vm791, %v784, %v788
        %v793 = vand.u32 2147483647, %v726
        %vm794 = vcmp.eq.f32.partialorder %v793, 8.507059e+37
        %v795 = vand.u32 %v726, 2147483648
        %v796 = vor.u32 1.1754944e-38, %v795
        %v797 = vsel %vm794, %v796, %v792
        %v798 = vmul.f32 %v692, %v797
        %v799 = vrcp.pop %v729
        %v800 = vmul.f32 %v729, %v799
        %v801 = vsub.f32 1.0, %v800
        %v802 = vmul.f32 %v799, %v801
        %v803 = vadd.f32 %v799, %v802
        %vm804 = vweird.f32 %v729
        %vm805 = vweird.f32 %v799
        %vm806 = vmor %vm804, %vm805
        %v807 = vsel %vm806, %v799, %v803
        %v808 = vand.u32 2147483647, %v729
        %vm809 = vcmp.eq.f32.partialorder %v808, 8.507059e+37
        %v810 = vand.u32 %v729, 2147483648
        %v811 = vor.u32 1.1754944e-38, %v810
        %v812 = vsel %vm809, %v811, %v807
        %v813 = vmul.f32 %v694, %v812
        %v814 = vrcp.pop %v732
        %v815 = vmul.f32 %v732, %v814
        %v816 = vsub.f32 1.0, %v815
        %v817 = vmul.f32 %v814, %v816
        %v818 = vadd.f32 %v814, %v817
        %vm819 = vweird.f32 %v732
        %vm820 = vweird.f32 %v814
        %vm821 = vmor %vm819, %vm820
        %v822 = vsel %vm821, %v814, %v818
        %v823 = vand.u32 2147483647, %v732
        %vm824 = vcmp.eq.f32.partialorder %v823, 8.507059e+37
        %v825 = vand.u32 %v732, 2147483648
        %v826 = vor.u32 1.1754944e-38, %v825
        %v827 = vsel %vm824, %v826, %v822
        %v828 = vmul.f32 %v696, %v827
        %v829 = vrcp.pop %v735
        %v830 = vmul.f32 %v735, %v829
        %v831 = vsub.f32 1.0, %v830
        %v832 = vmul.f32 %v829, %v831
        %v833 = vadd.f32 %v829, %v832
        %vm834 = vweird.f32 %v735
        %vm835 = vweird.f32 %v829
        %vm836 = vmor %vm834, %vm835
        %v837 = vsel %vm836, %v829, %v833
        %v838 = vand.u32 2147483647, %v735
        %vm839 = vcmp.eq.f32.partialorder %v838, 8.507059e+37
        %v840 = vand.u32 %v735, 2147483648
        %v841 = vor.u32 1.1754944e-38, %v840
        %v842 = vsel %vm839, %v841, %v837
        %v843 = vmul.f32 %v698, %v842
        %v844 = vrcp.pop %v738
        %v845 = vmul.f32 %v738, %v844
        %v846 = vsub.f32 1.0, %v845
        %v847 = vmul.f32 %v844, %v846
        %v848 = vadd.f32 %v844, %v847
        %vm849 = vweird.f32 %v738
        %vm850 = vweird.f32 %v844
        %vm851 = vmor %vm849, %vm850
        %v852 = vsel %vm851, %v844, %v848
        %v853 = vand.u32 2147483647, %v738
        %vm854 = vcmp.eq.f32.partialorder %v853, 8.507059e+37
        %v855 = vand.u32 %v738, 2147483648
        %v856 = vor.u32 1.1754944e-38, %v855
        %v857 = vsel %vm854, %v856, %v852
        %v858 = vmul.f32 %v700, %v857
        %v859 = vrcp.pop %v741
        %v860 = vmul.f32 %v741, %v859
        %v861 = vsub.f32 1.0, %v860
        %v862 = vmul.f32 %v859, %v861
        %v863 = vadd.f32 %v859, %v862
        %vm864 = vweird.f32 %v741
        %vm865 = vweird.f32 %v859
        %vm866 = vmor %vm864, %vm865
        %v867 = vsel %vm866, %v859, %v863
        %v868 = vand.u32 2147483647, %v741
        %vm869 = vcmp.eq.f32.partialorder %v868, 8.507059e+37
        %v870 = vand.u32 %v741, 2147483648
        %v871 = vor.u32 1.1754944e-38, %v870
        %v872 = vsel %vm869, %v871, %v867
        %v873 = vmul.f32 %v702, %v872
        %v874 = vrcp.pop %v744
        %v875 = vmul.f32 %v744, %v874
        %v876 = vsub.f32 1.0, %v875
        %v877 = vmul.f32 %v874, %v876
        %v878 = vadd.f32 %v874, %v877
        %vm879 = vweird.f32 %v744
        %vm880 = vweird.f32 %v874
        %vm881 = vmor %vm879, %vm880
        %v882 = vsel %vm881, %v874, %v878
        %v883 = vand.u32 2147483647, %v744
        %vm884 = vcmp.eq.f32.partialorder %v883, 8.507059e+37
        %v885 = vand.u32 %v744, 2147483648
        %v886 = vor.u32 1.1754944e-38, %v885
        %v887 = vsel %vm884, %v886, %v882
        %v888 = vmul.f32 %v704, %v887
        %v889 = vrcp.pop %v747
        %v890 = vmul.f32 %v747, %v889
        %v891 = vsub.f32 1.0, %v890
        %v892 = vmul.f32 %v889, %v891
        %v893 = vadd.f32 %v889, %v892
        %vm894 = vweird.f32 %v747
        %vm895 = vweird.f32 %v889
        %vm896 = vmor %vm894, %vm895
        %v897 = vsel %vm896, %v889, %v893
        %v898 = vand.u32 2147483647, %v747
        %vm899 = vcmp.eq.f32.partialorder %v898, 8.507059e+37
        %v900 = vand.u32 %v747, 2147483648
        %v901 = vor.u32 1.1754944e-38, %v900
        %v902 = vsel %vm899, %v901, %v897
        %v903 = vmul.f32 %v706, %v902
        %v904 = vrcp.pop %v750
        %v905 = vmul.f32 %v750, %v904
        %v906 = vsub.f32 1.0, %v905
        %v907 = vmul.f32 %v904, %v906
        %v908 = vadd.f32 %v904, %v907
        %vm909 = vweird.f32 %v750
        %vm910 = vweird.f32 %v904
        %vm911 = vmor %vm909, %vm910
        %v912 = vsel %vm911, %v904, %v908
        %v913 = vand.u32 2147483647, %v750
        %vm914 = vcmp.eq.f32.partialorder %v913, 8.507059e+37
        %v915 = vand.u32 %v750, 2147483648
        %v916 = vor.u32 1.1754944e-38, %v915
        %v917 = vsel %vm914, %v916, %v912
        %v918 = vmul.f32 %v708, %v917
        %v919 = vrcp.pop %v753
        %v920 = vmul.f32 %v753, %v919
        %v921 = vsub.f32 1.0, %v920
        %v922 = vmul.f32 %v919, %v921
        %v923 = vadd.f32 %v919, %v922
        %vm924 = vweird.f32 %v753
        %vm925 = vweird.f32 %v919
        %vm926 = vmor %vm924, %vm925
        %v927 = vsel %vm926, %v919, %v923
        %v928 = vand.u32 2147483647, %v753
        %vm929 = vcmp.eq.f32.partialorder %v928, 8.507059e+37
        %v930 = vand.u32 %v753, 2147483648
        %v931 = vor.u32 1.1754944e-38, %v930
        %v932 = vsel %vm929, %v931, %v927
        %v933 = vmul.f32 %v710, %v932
        %v934 = vrcp.pop %v756
        %v935 = vmul.f32 %v756, %v934
        %v936 = vsub.f32 1.0, %v935
        %v937 = vmul.f32 %v934, %v936
        %v938 = vadd.f32 %v934, %v937
        %vm939 = vweird.f32 %v756
        %vm940 = vweird.f32 %v934
        %vm941 = vmor %vm939, %vm940
        %v942 = vsel %vm941, %v934, %v938
        %v943 = vand.u32 2147483647, %v756
        %vm944 = vcmp.eq.f32.partialorder %v943, 8.507059e+37
        %v945 = vand.u32 %v756, 2147483648
        %v946 = vor.u32 1.1754944e-38, %v945
        %v947 = vsel %vm944, %v946, %v942
        %v948 = vmul.f32 %v712, %v947
        %v949 = vrcp.pop %v759
        %v950 = vmul.f32 %v759, %v949
        %v951 = vsub.f32 1.0, %v950
        %v952 = vmul.f32 %v949, %v951
        %v953 = vadd.f32 %v949, %v952
        %vm954 = vweird.f32 %v759
        %vm955 = vweird.f32 %v949
        %vm956 = vmor %vm954, %vm955
        %v957 = vsel %vm956, %v949, %v953
        %v958 = vand.u32 2147483647, %v759
        %vm959 = vcmp.eq.f32.partialorder %v958, 8.507059e+37
        %v960 = vand.u32 %v759, 2147483648
        %v961 = vor.u32 1.1754944e-38, %v960
        %v962 = vsel %vm959, %v961, %v957
        %v963 = vmul.f32 %v714, %v962
        %v964 = vrcp.pop %v762
        %v965 = vmul.f32 %v762, %v964
        %v966 = vsub.f32 1.0, %v965
        %v967 = vmul.f32 %v964, %v966
        %v968 = vadd.f32 %v964, %v967
        %vm969 = vweird.f32 %v762
        %vm970 = vweird.f32 %v964
        %vm971 = vmor %vm969, %vm970
        %v972 = vsel %vm971, %v964, %v968
        %v973 = vand.u32 2147483647, %v762
        %vm974 = vcmp.eq.f32.partialorder %v973, 8.507059e+37
        %v975 = vand.u32 %v762, 2147483648
        %v976 = vor.u32 1.1754944e-38, %v975
        %v977 = vsel %vm974, %v976, %v972
        %v978 = vmul.f32 %v716, %v977
        %v979 = vrcp.pop %v765
        %v980 = vmul.f32 %v765, %v979
        %v981 = vsub.f32 1.0, %v980
        %v982 = vmul.f32 %v979, %v981
        %v983 = vadd.f32 %v979, %v982
        %vm984 = vweird.f32 %v765
        %vm985 = vweird.f32 %v979
        %vm986 = vmor %vm984, %vm985
        %v987 = vsel %vm986, %v979, %v983
        %v988 = vand.u32 2147483647, %v765
        %vm989 = vcmp.eq.f32.partialorder %v988, 8.507059e+37
        %v990 = vand.u32 %v765, 2147483648
        %v991 = vor.u32 1.1754944e-38, %v990
        %v992 = vsel %vm989, %v991, %v987
        %v993 = vmul.f32 %v718, %v992
        %v994 = vrcp.pop %v768
        %v995 = vmul.f32 %v768, %v994
        %v996 = vsub.f32 1.0, %v995
        %v997 = vmul.f32 %v994, %v996
        %v998 = vadd.f32 %v994, %v997
        %vm999 = vweird.f32 %v768
        %vm1000 = vweird.f32 %v994
        %vm1001 = vmor %vm999, %vm1000
        %v1002 = vsel %vm1001, %v994, %v998
        %v1003 = vand.u32 2147483647, %v768
        %vm1004 = vcmp.eq.f32.partialorder %v1003, 8.507059e+37
        %v1005 = vand.u32 %v768, 2147483648
        %v1006 = vor.u32 1.1754944e-38, %v1005
        %v1007 = vsel %vm1004, %v1006, %v1002
        %v1008 = vmul.f32 %v720, %v1007
        %v1010 = vsel %vm624, %v783, 0
        %v1013 = vsel %vm624, %v798, 0
        %1015 = vmatpush.msra.mxu0 0.0
        %1016 = vmatpush.msra.mxu0 0.0
        %1017 = vmatpush.msra.mxu0 0.0
        %1018 = vmatpush.msra.mxu0 0.0
        %1019 = vmatpush.msra.mxu0 0.0
        %1020 = vmatpush.msra.mxu0 0.0
        %1021 = vmatpush.msra.mxu0 0.0
        %1022 = vmatpush.msra.mxu0 0.0
        %1023 = vmatpush.msra.mxu0 0.0
        %1024 = vmatpush.msra.mxu0 0.0
        %1025 = vmatpush.msra.mxu0 0.0
        %1026 = vmatpush.msra.mxu0 0.0
        %1027 = vmatpush.msra.mxu0 0.0
        %1028 = vmatpush.msra.mxu0 0.0
        %1029 = vmatpush.msra.mxu0 %v312
        %1030 = vmatpush.msra.mxu0 %v311
        %1031 = vmatmul.f32.gmra.mxu0 %v1010
        %v1032 = vpop.f32.mrf.mxu0
        %v1033 = vadd.f32 0.0, %v1032
        %1034 = vmatmul.f32.gmra.mxu0 %v1013
        %v1035 = vpop.f32.mrf.mxu0
        %v1036 = vadd.f32 0.0, %v1035
        %1037 = vdwg.mxu0
        %v1039 = vsel %vm624, %v813, 0
        %v1042 = vsel %vm624, %v828, 0
        %1044 = vmatpush.msra.mxu0 0.0
        %1045 = vmatpush.msra.mxu0 0.0
        %1046 = vmatpush.msra.mxu0 0.0
        %1047 = vmatpush.msra.mxu0 0.0
        %1048 = vmatpush.msra.mxu0 0.0
        %1049 = vmatpush.msra.mxu0 0.0
        %1050 = vmatpush.msra.mxu0 0.0
        %1051 = vmatpush.msra.mxu0 0.0
        %1052 = vmatpush.msra.mxu0 0.0
        %1053 = vmatpush.msra.mxu0 0.0
        %1054 = vmatpush.msra.mxu0 0.0
        %1055 = vmatpush.msra.mxu0 0.0
        %1056 = vmatpush.msra.mxu0 0.0
        %1057 = vmatpush.msra.mxu0 0.0
        %1058 = vmatpush.msra.mxu0 %v314
        %1059 = vmatpush.msra.mxu0 %v313
        %1060 = vmatmul.f32.gmra.mxu0 %v1039
        %v1061 = vpop.f32.mrf.mxu0
        %v1062 = vadd.f32 0.0, %v1061
        %1063 = vmatmul.f32.gmra.mxu0 %v1042
        %v1064 = vpop.f32.mrf.mxu0
        %v1065 = vadd.f32 0.0, %v1064
        %1066 = vdwg.mxu0
        %v1068 = vsel %vm624, %v843, 0
        %v1071 = vsel %vm624, %v858, 0
        %1073 = vmatpush.msra.mxu0 0.0
        %1074 = vmatpush.msra.mxu0 0.0
        %1075 = vmatpush.msra.mxu0 0.0
        %1076 = vmatpush.msra.mxu0 0.0
        %1077 = vmatpush.msra.mxu0 0.0
        %1078 = vmatpush.msra.mxu0 0.0
        %1079 = vmatpush.msra.mxu0 0.0
        %1080 = vmatpush.msra.mxu0 0.0
        %1081 = vmatpush.msra.mxu0 0.0
        %1082 = vmatpush.msra.mxu0 0.0
        %1083 = vmatpush.msra.mxu0 0.0
        %1084 = vmatpush.msra.mxu0 0.0
        %1085 = vmatpush.msra.mxu0 0.0
        %1086 = vmatpush.msra.mxu0 0.0
        %1087 = vmatpush.msra.mxu0 %v316
        %1088 = vmatpush.msra.mxu0 %v315
        %1089 = vmatmul.f32.gmra.mxu0 %v1068
        %v1090 = vpop.f32.mrf.mxu0
        %v1091 = vadd.f32 0.0, %v1090
        %1092 = vmatmul.f32.gmra.mxu0 %v1071
        %v1093 = vpop.f32.mrf.mxu0
        %v1094 = vadd.f32 0.0, %v1093
        %1095 = vdwg.mxu0
        %v1097 = vsel %vm624, %v873, 0
        %v1100 = vsel %vm624, %v888, 0
        %1102 = vmatpush.msra.mxu0 0.0
        %1103 = vmatpush.msra.mxu0 0.0
        %1104 = vmatpush.msra.mxu0 0.0
        %1105 = vmatpush.msra.mxu0 0.0
        %1106 = vmatpush.msra.mxu0 0.0
        %1107 = vmatpush.msra.mxu0 0.0
        %1108 = vmatpush.msra.mxu0 0.0
        %1109 = vmatpush.msra.mxu0 0.0
        %1110 = vmatpush.msra.mxu0 0.0
        %1111 = vmatpush.msra.mxu0 0.0
        %1112 = vmatpush.msra.mxu0 0.0
        %1113 = vmatpush.msra.mxu0 0.0
        %1114 = vmatpush.msra.mxu0 0.0
        %1115 = vmatpush.msra.mxu0 0.0
        %1116 = vmatpush.msra.mxu0 %v318
        %1117 = vmatpush.msra.mxu0 %v317
        %1118 = vmatmul.f32.gmra.mxu0 %v1097
        %v1119 = vpop.f32.mrf.mxu0
        %v1120 = vadd.f32 0.0, %v1119
        %1121 = vmatmul.f32.gmra.mxu0 %v1100
        %v1122 = vpop.f32.mrf.mxu0
        %v1123 = vadd.f32 0.0, %v1122
        %1124 = vdwg.mxu0
        %v1126 = vsel %vm624, %v903, 0
        %v1129 = vsel %vm624, %v918, 0
        %1131 = vmatpush.msra.mxu0 0.0
        %1132 = vmatpush.msra.mxu0 0.0
        %1133 = vmatpush.msra.mxu0 0.0
        %1134 = vmatpush.msra.mxu0 0.0
        %1135 = vmatpush.msra.mxu0 0.0
        %1136 = vmatpush.msra.mxu0 0.0
        %1137 = vmatpush.msra.mxu0 0.0
        %1138 = vmatpush.msra.mxu0 0.0
        %1139 = vmatpush.msra.mxu0 0.0
        %1140 = vmatpush.msra.mxu0 0.0
        %1141 = vmatpush.msra.mxu0 0.0
        %1142 = vmatpush.msra.mxu0 0.0
        %1143 = vmatpush.msra.mxu0 0.0
        %1144 = vmatpush.msra.mxu0 0.0
        %1145 = vmatpush.msra.mxu0 %v320
        %1146 = vmatpush.msra.mxu0 %v319
        %1147 = vmatmul.f32.gmra.mxu0 %v1126
        %v1148 = vpop.f32.mrf.mxu0
        %v1149 = vadd.f32 0.0, %v1148
        %1150 = vmatmul.f32.gmra.mxu0 %v1129
        %v1151 = vpop.f32.mrf.mxu0
        %v1152 = vadd.f32 0.0, %v1151
        %1153 = vdwg.mxu0
        %v1155 = vsel %vm624, %v933, 0
        %v1158 = vsel %vm624, %v948, 0
        %1160 = vmatpush.msra.mxu0 0.0
        %1161 = vmatpush.msra.mxu0 0.0
        %1162 = vmatpush.msra.mxu0 0.0
        %1163 = vmatpush.msra.mxu0 0.0
        %1164 = vmatpush.msra.mxu0 0.0
        %1165 = vmatpush.msra.mxu0 0.0
        %1166 = vmatpush.msra.mxu0 0.0
        %1167 = vmatpush.msra.mxu0 0.0
        %1168 = vmatpush.msra.mxu0 0.0
        %1169 = vmatpush.msra.mxu0 0.0
        %1170 = vmatpush.msra.mxu0 0.0
        %1171 = vmatpush.msra.mxu0 0.0
        %1172 = vmatpush.msra.mxu0 0.0
        %1173 = vmatpush.msra.mxu0 0.0
        %1174 = vmatpush.msra.mxu0 %v322
        %1175 = vmatpush.msra.mxu0 %v321
        %1176 = vmatmul.f32.gmra.mxu0 %v1155
        %v1177 = vpop.f32.mrf.mxu0
        %v1178 = vadd.f32 0.0, %v1177
        %1179 = vmatmul.f32.gmra.mxu0 %v1158
        %v1180 = vpop.f32.mrf.mxu0
        %v1181 = vadd.f32 0.0, %v1180
        %1182 = vdwg.mxu0
        %v1184 = vsel %vm624, %v963, 0
        %v1187 = vsel %vm624, %v978, 0
        %1189 = vmatpush.msra.mxu0 0.0
        %1190 = vmatpush.msra.mxu0 0.0
        %1191 = vmatpush.msra.mxu0 0.0
        %1192 = vmatpush.msra.mxu0 0.0
        %1193 = vmatpush.msra.mxu0 0.0
        %1194 = vmatpush.msra.mxu0 0.0
        %1195 = vmatpush.msra.mxu0 0.0
        %1196 = vmatpush.msra.mxu0 0.0
        %1197 = vmatpush.msra.mxu0 0.0
        %1198 = vmatpush.msra.mxu0 0.0
        %1199 = vmatpush.msra.mxu0 0.0
        %1200 = vmatpush.msra.mxu0 0.0
        %1201 = vmatpush.msra.mxu0 0.0
        %1202 = vmatpush.msra.mxu0 0.0
        %1203 = vmatpush.msra.mxu0 %v324
        %1204 = vmatpush.msra.mxu0 %v323
        %1205 = vmatmul.f32.gmra.mxu0 %v1184
        %v1206 = vpop.f32.mrf.mxu0
        %v1207 = vadd.f32 0.0, %v1206
        %1208 = vmatmul.f32.gmra.mxu0 %v1187
        %v1209 = vpop.f32.mrf.mxu0
        %v1210 = vadd.f32 0.0, %v1209
        %1211 = vdwg.mxu0
        %v1213 = vsel %vm624, %v993, 0
        %v1216 = vsel %vm624, %v1008, 0
        %1218 = vmatpush.msra.mxu0 0.0
        %1219 = vmatpush.msra.mxu0 0.0
        %1220 = vmatpush.msra.mxu0 0.0
        %1221 = vmatpush.msra.mxu0 0.0
        %1222 = vmatpush.msra.mxu0 0.0
        %1223 = vmatpush.msra.mxu0 0.0
        %1224 = vmatpush.msra.mxu0 0.0
        %1225 = vmatpush.msra.mxu0 0.0
        %1226 = vmatpush.msra.mxu0 0.0
        %1227 = vmatpush.msra.mxu0 0.0
        %1228 = vmatpush.msra.mxu0 0.0
        %1229 = vmatpush.msra.mxu0 0.0
        %1230 = vmatpush.msra.mxu0 0.0
        %1231 = vmatpush.msra.mxu0 0.0
        %1232 = vmatpush.msra.mxu0 %v326
        %1233 = vmatpush.msra.mxu0 %v325
        %1234 = vmatmul.f32.gmra.mxu0 %v1213
        %v1235 = vpop.f32.mrf.mxu0
        %v1236 = vadd.f32 0.0, %v1235
        %1237 = vmatmul.f32.gmra.mxu0 %v1216
        %v1238 = vpop.f32.mrf.mxu0
        %v1239 = vadd.f32 0.0, %v1238
        %1240 = vdwg.mxu0
        %1241 = vst.msk [vmem:[%s274] sm:$0xff] %vm327, %v1033
        %1242 = vst.msk [vmem:[%s274 + $0x8] sm:$0xff] %vm327, %v1036
        %1243 = vst.msk [vmem:[%s274 + $0x10] sm:$0xff] %vm327, %v1062
        %1244 = vst.msk [vmem:[%s274 + $0x18] sm:$0xff] %vm327, %v1065
        %1245 = vst.msk [vmem:[%s274 + $0x20] sm:$0xff] %vm327, %v1091
        %1246 = vst.msk [vmem:[%s274 + $0x28] sm:$0xff] %vm327, %v1094
        %1247 = vst.msk [vmem:[%s274 + $0x30] sm:$0xff] %vm327, %v1120
        %1248 = vst.msk [vmem:[%s274 + $0x38] sm:$0xff] %vm327, %v1123
        %1249 = vst.msk [vmem:[%s274 + $0x40] sm:$0xff] %vm327, %v1149
        %1250 = vst.msk [vmem:[%s274 + $0x48] sm:$0xff] %vm327, %v1152
        %1251 = vst.msk [vmem:[%s274 + $0x50] sm:$0xff] %vm327, %v1178
        %1252 = vst.msk [vmem:[%s274 + $0x58] sm:$0xff] %vm327, %v1181
        %1253 = vst.msk [vmem:[%s274 + $0x60] sm:$0xff] %vm327, %v1207
        %1254 = vst.msk [vmem:[%s274 + $0x68] sm:$0xff] %vm327, %v1210
        %1255 = vst.msk [vmem:[%s274 + $0x70] sm:$0xff] %vm327, %v1236
        %1256 = vst.msk [vmem:[%s274 + $0x78] sm:$0xff] %vm327, %v1239
        %s1257 = sand.u32 %s109, 1
        %s1258 = scalar_lea.sflag [#allocation4], %s1257
        %s1259 = sand.u32 %s109, 1
        %s1260 = smul.addr %s1259, 128
        %s1261 = scalar_lea.vmem [#allocation8], %s1260
        // Predicated region
        $region45: #{_lambda_.1} parent=31 // pred_check
          %p1262 = pneg %p119
        $region46: #{_lambda_.1} parent=31 // pred_check_branch
          %1264 = sbr.rel (%p1262) target = $region48
        $region47: #{_lambda_.1} parent=31 // pred_region
          %s1265 = smul.u32 8, %s23
          %1267 = vsyncadd %s1258, 0
          %s1268 = smul.addr %s1265, 2
          %s1269 = smul.addr %s1268, 8
          %s1270 = scalar_lea.hbm %s3, %s1269
          %s1271 = sshll.u32 %s1261, 4
          %s1272 = int_to_ptr.vmem [resolvable:$true] %s1271
          %s1273 = sshll.u32 %s1270, 4
          %s1274 = int_to_ptr.hbm [resolvable:$true] %s1273
          %1279 = dma.vmem_to_hbm [thread:$0]  %s1272, 2048, %s1274, %s1258, 128, 128, 8
        $region48: #{_lambda_.1} parent=31 // pred_fallthru
          _
      $region32: #{_lambda_.1} parent=5 // pred_fallthru
        _
      %p1280 = scmp.le.s32.totalorder 2, %s18
      // Predicated region
      $region49: #{_lambda_.1} parent=5 // pred_check
        %p1281 = pneg %p1280
      $region50: #{_lambda_.1} parent=5 // pred_check_branch
        %1283 = sbr.rel (%p1281) target = $region52
      $region51: #{_lambda_.1} parent=5 // pred_region
        %s1284 = ssub.s32 %s18, 2
        // Predicated region
        $region53: #{_lambda_.1} parent=51 // pred_check
          %p1285 = pneg %p125
        $region54: #{_lambda_.1} parent=51 // pred_check_branch
          %1287 = sbr.rel (%p1285) target = $region56
        $region55: #{_lambda_.1} parent=51 // pred_region
          %s1288 = sand.u32 %s110, 1
          %s1289 = scalar_lea.sflag [#allocation4], %s1288
          %s1290 = sand.u32 %s110, 1
          %s1291 = smul.addr %s1290, 128
          %s1292 = scalar_lea.vmem [#allocation8], %s1291
          %1294 = dma.done %s1289, 2048
        $region56: #{_lambda_.1} parent=51 // pred_fallthru
          _
      $region52: #{_lambda_.1} parent=5 // pred_fallthru
        _
    $region6: #{_lambda_.1} parent=1 // loop_footer
      %s22 = sadd.s32 1, %s18
    $region7: #{_lambda_.1} parent=1 // loop_footer_branch
      %17 = sbr.rel target = $region3
    $region8: #{_lambda_.1} parent=1 // loop_exit
      _
    %1295 = vsyncpa [#allocation3], 1
    %s1296 = scalar_lea.sflag [#allocation3], 1
    %1297 = vsyncpa %s1296, 1
    %1298 = vsyncpa [#allocation6], 1
    %s1299 = scalar_lea.sflag [#allocation6], 1
    %1300 = vsyncpa %s1299, 1
    %1301 = vsyncpa [#allocation4], 1
    %s1302 = scalar_lea.sflag [#allocation4], 1
    %1303 = vsyncpa %s1302, 1

</llo_original>
